<compile_context>
chip_gen: v7x
topology: tpu7x:2x2x1
jax: 0.10.0
libtpu: 0.0.40
codegen_flags: <defaults>
</compile_context>

<pallas_src>
import functools
import math
from typing import Dict, List, Sequence

import jax
import jax.numpy as jnp
from jax.experimental import pallas as pl
from jax.experimental.pallas import tpu as pltpu


# Tensors smaller than this bypass the kernel: launch overhead >> copy time,
# and returning the immutable input is already a correct identity.
_MIN_KERNEL_BYTES = 64 * 1024


@functools.lru_cache(maxsize=None)
def _dma_policy():
    """(max concurrent DMA streams, target bytes per chunk) for this TPU gen."""
    try:
        kind = jax.devices()[0].device_kind.lower()
    except Exception:  # pragma: no cover - defensive
        kind = ""
    if "v5 lite" in kind or "v5lite" in kind or "v5e" in kind:
        # ~0.82 TB/s HBM: 2-4 MiB-scale streams already saturate read+write.
        return 4, 2 * 1024 * 1024
    if "v6" in kind:
        # ~1.4 TB/s HBM.
        return 8, 2 * 1024 * 1024
    if "v7" in kind or "7x" in kind:
        # ~3.2 TB/s HBM: need more and larger chunks in flight.
        return 16, 4 * 1024 * 1024
    return 8, 2 * 1024 * 1024


def _copy_shape(shape):
    """Canonical lane-dense copy shape: (rows, 128) when possible, else 1-D."""
    e = int(math.prod(shape)) if shape else 1
    if e > 0 and e % 128 == 0:
        return (e // 128, 128)
    return (e,)


def _chunk_plan(copy_shape, itemsize, target_chunk_bytes, max_streams):
    """Static (start_row, n_rows) chunks; cdiv split + explicit remainder."""
    if len(copy_shape) != 2:
        return ((0, copy_shape[0]),)
    rows, row_elems = copy_shape
    nbytes = rows * row_elems * itemsize
    nchunks = int(max(1, min(nbytes // target_chunk_bytes, max_streams, rows)))
    if nchunks <= 1:
        return ((0, rows),)
    rows_per_chunk = -(-rows // nchunks)            # cdiv
    rows_per_chunk = -(-rows_per_chunk // 8) * 8    # 8-row (sublane) aligned starts
    plan = []
    start = 0
    while start < rows:
        size = min(rows_per_chunk, rows - start)
        plan.append((start, size))
        start += size
    return tuple(plan)


def _make_fused_copy_kernel(plans):
    """HBM -> HBM identity copy of several tensors in one kernel.

    All refs live in HBM (`memory_space=pl.ANY`), so every copy is a direct
    DMA -- no VMEM round trip, no vector load/store work.  Every DMA for
    every tensor is started before any is waited on, so multiple DMA streams
    are outstanding concurrently across tensors and chunks.
    """
    n = len(plans)

    def kernel(*refs):
        in_refs = refs[:n]
        out_refs = refs[n:2 * n]
        sems = refs[2 * n]
        copies = []
        s = 0
        for i in range(n):              # static (trace-time) unroll
            plan = plans[i]
            whole = len(plan) == 1
            for (start, size) in plan:
                if whole:
                    cp = pltpu.make_async_copy(in_refs[i], out_refs[i],
                                               sems.at[s])
                else:
                    cp = pltpu.make_async_copy(
                        in_refs[i].at[pl.ds(start, size)],
                        out_refs[i].at[pl.ds(start, size)],
                        sems.at[s])
                cp.start()
                copies.append(cp)
                s += 1
        for cp in copies:               # wait only after everything is in flight
            cp.wait()

    return kernel


@functools.lru_cache(maxsize=None)
def _build_fused_copy(sig, target_chunk_bytes, max_streams):
    """Build (and cache) one jitted fused HBM->HBM copy for a tensor signature.

    `sig` is a tuple of (original_shape, dtype_name) per tensor.
    """
    orig_shapes, copy_shapes, plans, dtypes = [], [], [], []
    total_bytes = 0
    for shape, dname in sig:
        dt = jnp.dtype(dname)
        cshape = _copy_shape(shape)
        orig_shapes.append(shape)
        copy_shapes.append(cshape)
        plans.append(_chunk_plan(cshape, dt.itemsize, target_chunk_bytes,
                                 max_streams))
        dtypes.append(dt)
        total_bytes += int(math.prod(shape)) * dt.itemsize
    total_chunks = sum(len(p) for p in plans)
    n = len(sig)

    copy_call = pl.pallas_call(
        _make_fused_copy_kernel(tuple(plans)),
        out_shape=tuple(jax.ShapeDtypeStruct(cs, dt)
                        for cs, dt in zip(copy_shapes, dtypes)),
        in_specs=[pl.BlockSpec(memory_space=pl.ANY) for _ in range(n)],
        out_specs=tuple(pl.BlockSpec(memory_space=pl.ANY) for _ in range(n)),
        scratch_shapes=[pltpu.SemaphoreType.DMA((total_chunks,))],
        compiler_params=pltpu.CompilerParams(has_side_effects=True),
        cost_estimate=pl.CostEstimate(flops=0, transcendentals=0,
                                      bytes_accessed=2 * total_bytes),
    )

    @jax.jit
    def run(*tensors):
        # Metadata reshapes live inside the jit so they compile to bitcasts.
        flat = [t.reshape(cs) for t, cs in zip(tensors, copy_shapes)]
        outs = copy_call(*flat)
        if not isinstance(outs, (tuple, list)):
            outs = (outs,)
        return tuple(o.reshape(s) for o, s in zip(outs, orig_shapes))

    return run


class BaseWrapper:
    """JAX/Pallas analogue of mmdeploy's BaseWrapper.

    Args:
        output_names: Names of model outputs in order; used by
            `output_to_list` to convert the output dict into an ordered list.
        copy_outputs: If False (default), forward() is zero-copy (JAX arrays
            are immutable, so the input *is* a correct identity output).  If
            True, each eligible output is materialized in a fresh HBM buffer
            by a single fused Pallas DMA kernel.
    """

    def __init__(self, output_names: Sequence[str], copy_outputs: bool = False):
        self._output_names = list(output_names)
        self._copy_outputs = copy_outputs

    @staticmethod
    def get_backend_file_count() -> int:
        return 1

    @property
    def output_names(self):
        return self._output_names

    @output_names.setter
    def output_names(self, value):
        self._output_names = value

    def forward(self, inputs: Dict[str, jax.Array]) -> Dict[str, jax.Array]:
        # Abstract in the original class; here the "backend" is an identity.
        # Output names map positionally onto the (insertion-ordered) inputs.
        tensors = [t if isinstance(t, jax.Array) else jnp.asarray(t)
                   for t in inputs.values()]
        assert len(tensors) == len(self._output_names), (
            "number of inputs must match number of output names for this "
            "synthetic identity backend")
        if self._copy_outputs:
            outputs = self._materialize(tensors)
        else:
            outputs = tensors  # zero-copy identity: 0 bytes of HBM traffic
        return dict(zip(self._output_names, outputs))

    def _materialize(self, tensors):
        """Copy eligible tensors into fresh buffers via ONE fused Pallas call."""
        outs = list(tensors)
        sel, sig = [], []
        for i, t in enumerate(tensors):
            nbytes = t.size * jnp.dtype(t.dtype).itemsize
            if t.ndim == 0 or nbytes < _MIN_KERNEL_BYTES:
                continue  # tiny tensor: launch overhead dominates -> bypass
            sel.append(i)
            sig.append((tuple(int(d) for d in t.shape),
                        jnp.dtype(t.dtype).name))
        if sel:
            max_streams, target_chunk_bytes = _dma_policy()
            run = _build_fused_copy(tuple(sig), target_chunk_bytes, max_streams)
            results = run(*[tensors[i] for i in sel])
            for i, r in zip(sel, results):
                outs[i] = r
        return outs

    def __call__(self, inputs: Dict[str, jax.Array]) -> Dict[str, jax.Array]:
        return self.forward(inputs)

    def output_to_list(
            self, output_dict: Dict[str, jax.Array]) -> List[jax.Array]:
        return [output_dict[name] for name in self._output_names]


if __name__ == "__main__":
    key = jax.random.PRNGKey(0)
    k1, k2, k3, k4 = jax.random.split(key, 4)

    # Small, deterministic example inputs:
    #   - NCHW image  (2,4,64,64)  f32 = 128 KiB -> fused kernel path
    #   - feature vec (2,32)       f32 = 256 B   -> tiny-tensor bypass
    #   - feature map (8,128,128)  f32 = 512 KiB -> fused kernel path
    x = jax.random.normal(k1, (2, 4, 64, 64), dtype=jnp.float32)
    feat = jax.random.normal(k2, (2, 32), dtype=jnp.float32)
    fmap = jax.random.normal(k3, (8, 128, 128), dtype=jnp.float32)

    names = ["dets", "labels", "masks"]

    # 1) Default zero-copy path (top perf recommendation: no HBM traffic).
    wrapper = BaseWrapper(output_names=names)
    out_zero = wrapper({"input": x, "aux": feat, "fmap": fmap})
    lst_zero = wrapper.output_to_list(out_zero)
    assert bool(jnp.array_equal(lst_zero[0], x))
    assert bool(jnp.array_equal(lst_zero[1], feat))
    assert bool(jnp.array_equal(lst_zero[2], fmap))

    # 2) Materializing path: ONE fused Pallas HBM->HBM DMA kernel covering all
    #    kernel-eligible tensors (x and fmap), tiny feat bypassed.
    wrapper_copy = BaseWrapper(output_names=names, copy_outputs=True)
    out_copy = wrapper_copy({"input": x, "aux": feat, "fmap": fmap})
    lst_copy = wrapper_copy.output_to_list(out_copy)
    jax.block_until_ready(lst_copy)

    assert lst_copy[0].shape == x.shape and lst_copy[0].dtype == x.dtype
    assert lst_copy[1].shape == feat.shape and lst_copy[1].dtype == feat.dtype
    assert lst_copy[2].shape == fmap.shape and lst_copy[2].dtype == fmap.dtype
    assert bool(jnp.array_equal(lst_copy[0], x))
    assert bool(jnp.array_equal(lst_copy[1], feat))
    assert bool(jnp.array_equal(lst_copy[2], fmap))

    # 3) Coverage for the multi-stream chunked-DMA path: force a small chunk
    #    target so a 500 KiB tensor is split into 3 concurrent DMAs, including
    #    a remainder chunk (1000 rows -> 336 + 336 + 328).
    y = jax.random.normal(k4, (1000, 128), dtype=jnp.float32)
    chunked = _build_fused_copy((((1000, 128), "float32"),), 128 * 1024, 8)
    (y_copy,) = chunked(y)
    jax.block_until_ready(y_copy)
    assert y_copy.shape == y.shape and y_copy.dtype == y.dtype
    assert bool(jnp.array_equal(y_copy, y))

    assert wrapper.get_backend_file_count() == 1
    assert wrapper.output_names == names

    print("KERNEL_OK")
</pallas_src>

<mosaic_0001>
module attributes {stable_mosaic.version = 11 : i64} {
  func.func @kernel(%arg0: memref<256x128xf32, #tpu.memory_space<any>>, %arg1: memref<1024x128xf32, #tpu.memory_space<any>>, %arg2: memref<256x128xf32, #tpu.memory_space<any>>, %arg3: memref<1024x128xf32, #tpu.memory_space<any>>, %arg4: memref<2x!tpu.dma_semaphore, #tpu.memory_space<semaphore_mem>>) attributes {dimension_semantics = [], scalar_prefetch = 0 : i64, scratch_operands = 1 : i64, tpu.core_type = #tpu.core_type<tc>} {
    %c0_i32 = arith.constant 0 : i32
    %0 = tpu.memref_slice %arg4[%c0_i32] : memref<2x!tpu.dma_semaphore, #tpu.memory_space<semaphore_mem>> -> memref<1x!tpu.dma_semaphore, #tpu.memory_space<semaphore_mem>>
    %1 = tpu.memref_squeeze %0 : memref<1x!tpu.dma_semaphore, #tpu.memory_space<semaphore_mem>> -> memref<!tpu.dma_semaphore, #tpu.memory_space<semaphore_mem>>
    tpu.enqueue_dma source(%arg0 : memref<256x128xf32, #tpu.memory_space<any>>) target(%arg2 : memref<256x128xf32, #tpu.memory_space<any>>) target_semaphore(%1 : memref<!tpu.dma_semaphore, #tpu.memory_space<semaphore_mem>>)
    %c1_i32 = arith.constant 1 : i32
    %2 = tpu.memref_slice %arg4[%c1_i32] : memref<2x!tpu.dma_semaphore, #tpu.memory_space<semaphore_mem>> -> memref<1x!tpu.dma_semaphore, #tpu.memory_space<semaphore_mem>>
    %3 = tpu.memref_squeeze %2 : memref<1x!tpu.dma_semaphore, #tpu.memory_space<semaphore_mem>> -> memref<!tpu.dma_semaphore, #tpu.memory_space<semaphore_mem>>
    tpu.enqueue_dma source(%arg1 : memref<1024x128xf32, #tpu.memory_space<any>>) target(%arg3 : memref<1024x128xf32, #tpu.memory_space<any>>) target_semaphore(%3 : memref<!tpu.dma_semaphore, #tpu.memory_space<semaphore_mem>>)
    %c0_i32_0 = arith.constant 0 : i32
    %4 = tpu.memref_slice %arg4[%c0_i32_0] : memref<2x!tpu.dma_semaphore, #tpu.memory_space<semaphore_mem>> -> memref<1x!tpu.dma_semaphore, #tpu.memory_space<semaphore_mem>>
    %5 = tpu.memref_squeeze %4 : memref<1x!tpu.dma_semaphore, #tpu.memory_space<semaphore_mem>> -> memref<!tpu.dma_semaphore, #tpu.memory_space<semaphore_mem>>
    tpu.wait_dma2 semaphore(%5 : memref<!tpu.dma_semaphore, #tpu.memory_space<semaphore_mem>>) src(%arg0 : memref<256x128xf32, #tpu.memory_space<any>>) dst(%arg2 : memref<256x128xf32, #tpu.memory_space<any>>)
    %c1_i32_1 = arith.constant 1 : i32
    %6 = tpu.memref_slice %arg4[%c1_i32_1] : memref<2x!tpu.dma_semaphore, #tpu.memory_space<semaphore_mem>> -> memref<1x!tpu.dma_semaphore, #tpu.memory_space<semaphore_mem>>
    %7 = tpu.memref_squeeze %6 : memref<1x!tpu.dma_semaphore, #tpu.memory_space<semaphore_mem>> -> memref<!tpu.dma_semaphore, #tpu.memory_space<semaphore_mem>>
    tpu.wait_dma2 semaphore(%7 : memref<!tpu.dma_semaphore, #tpu.memory_space<semaphore_mem>>) src(%arg1 : memref<1024x128xf32, #tpu.memory_space<any>>) dst(%arg3 : memref<1024x128xf32, #tpu.memory_space<any>>)
    return
  }
}

</mosaic_0001>

<llo_original>
// kernel: run.1
$region0: #{run.1}
  #allocation0 [shape = 'u32[]', space=smem, size = 0x4, offset = 0x4, fixed_abs, tag = 'smem constant byte address 0x4 - core index']
  #allocation1 [shape = 'u32[144,128]{1,0:T(1,128)}', space=vmem, size = 0x12000, scoped, tag = 'internal scratch']
  #allocation2 [shape = 's32[2]{0}', space=sflag, size = 0x8, scoped, tag = 'scratch operand']
  #allocation3 [shape = 's32[]', space=sflag, size = 0x4, offset = 0, fixed_abs, tag = 'sflag constant byte address 0x0 - dummy sync flag']
  #allocation4 [shape = 's32[]', space=sflag, size = 0x4, offset = 0, fixed_abs, tag = 'sflag constant byte address 0x0 - dummy sync flag']
  #allocation5 [shape = 'u32[0]{0}', space=smem, size = 0, offset = 0, fixed_abs, tag = 'smem constant byte address 0x0 - null']
  %s0 = inlined_call_operand.vmem [shape: f32[256,128], index: 0, kind: input, shape index: {}]
  %s1 = inlined_call_operand.hbm [shape: f32[1024,128], index: 1, kind: input, shape index: {}]
  %s2 = inlined_call_operand.vmem [shape: f32[256,128], index: 2, kind: output, shape index: {0}]
  %s3 = inlined_call_operand.hbm [shape: f32[1024,128], index: 3, kind: output, shape index: {1}]
  %4 = xla_tuple %s2, %s3
  %s5 = sld [smem:[#allocation0]]
  $region36: #{run.1} parent=0
    _
  %s7 = ssub.s32 1, %s5
  %s8 = scalar_select 0, %s7, %s5
  %p10 = scmp.lt.u32.totalorder 256, 8
  %p11 = pneg %p10
  // Predicated region
  $region2: #{run.1} parent=0 // pred_check
    _
  $region3: #{run.1} parent=0 // pred_check_branch
    %13 = sbr.rel (%p10) target = $region5
  $region4: #{run.1} parent=0 // pred_region
    %s28 = sand.u32 256, 7
    %p29 = scmp.eq.s32.totalorder %s28, 0
    // Predicated region
    $region17: #{run.1} parent=4 // pred_check
      %p30 = pneg %p29
    $region18: #{run.1} parent=4 // pred_check_branch
      %32 = sbr.rel (%p30) target = $region20
    $region19: #{run.1} parent=4 // pred_region
      loop: start=0, step=1, limit=1
      $region21: #{run.1} parent=19 // loop_pre_header
        _
      $region22: #{run.1} parent=19 // loop_header
        %s34 = sphi 0, %s38
        %p35 = scmp.ge.s32.totalorder %s34, 1
        %s39 = sphi %s0, %s0
        %s40 = sphi %s2, %s2
      $region23: #{run.1} parent=19 // loop_header_branch
        %37 = sbr.rel (%p35) target = $region27
      $region24: #{run.1} parent=19 // loop_body
        %v41 = vld [vmem:[%s39] sm:$0xff]
        %42 = vst [vmem:[%s40] sm:$0xff] %v41
        %v43 = vld [vmem:[%s39 + $0x8] sm:$0xff]
        %44 = vst [vmem:[%s40 + $0x8] sm:$0xff] %v43
        %v45 = vld [vmem:[%s39 + $0x10] sm:$0xff]
        %46 = vst [vmem:[%s40 + $0x10] sm:$0xff] %v45
        %v47 = vld [vmem:[%s39 + $0x18] sm:$0xff]
        %48 = vst [vmem:[%s40 + $0x18] sm:$0xff] %v47
        %v49 = vld [vmem:[%s39 + $0x20] sm:$0xff]
        %50 = vst [vmem:[%s40 + $0x20] sm:$0xff] %v49
        %v51 = vld [vmem:[%s39 + $0x28] sm:$0xff]
        %52 = vst [vmem:[%s40 + $0x28] sm:$0xff] %v51
        %v53 = vld [vmem:[%s39 + $0x30] sm:$0xff]
        %54 = vst [vmem:[%s40 + $0x30] sm:$0xff] %v53
        %v55 = vld [vmem:[%s39 + $0x38] sm:$0xff]
        %56 = vst [vmem:[%s40 + $0x38] sm:$0xff] %v55
        %v57 = vld [vmem:[%s39 + $0x40] sm:$0xff]
        %58 = vst [vmem:[%s40 + $0x40] sm:$0xff] %v57
        %v59 = vld [vmem:[%s39 + $0x48] sm:$0xff]
        %60 = vst [vmem:[%s40 + $0x48] sm:$0xff] %v59
        %v61 = vld [vmem:[%s39 + $0x50] sm:$0xff]
        %62 = vst [vmem:[%s40 + $0x50] sm:$0xff] %v61
        %v63 = vld [vmem:[%s39 + $0x58] sm:$0xff]
        %64 = vst [vmem:[%s40 + $0x58] sm:$0xff] %v63
        %v65 = vld [vmem:[%s39 + $0x60] sm:$0xff]
        %66 = vst [vmem:[%s40 + $0x60] sm:$0xff] %v65
        %v67 = vld [vmem:[%s39 + $0x68] sm:$0xff]
        %68 = vst [vmem:[%s40 + $0x68] sm:$0xff] %v67
        %v69 = vld [vmem:[%s39 + $0x70] sm:$0xff]
        %70 = vst [vmem:[%s40 + $0x70] sm:$0xff] %v69
        %v71 = vld [vmem:[%s39 + $0x78] sm:$0xff]
        %72 = vst [vmem:[%s40 + $0x78] sm:$0xff] %v71
        %v73 = vld [vmem:[%s39 + $0x80] sm:$0xff]
        %74 = vst [vmem:[%s40 + $0x80] sm:$0xff] %v73
        %v75 = vld [vmem:[%s39 + $0x88] sm:$0xff]
        %76 = vst [vmem:[%s40 + $0x88] sm:$0xff] %v75
        %v77 = vld [vmem:[%s39 + $0x90] sm:$0xff]
        %78 = vst [vmem:[%s40 + $0x90] sm:$0xff] %v77
        %v79 = vld [vmem:[%s39 + $0x98] sm:$0xff]
        %80 = vst [vmem:[%s40 + $0x98] sm:$0xff] %v79
        %v81 = vld [vmem:[%s39 + $0xa0] sm:$0xff]
        %82 = vst [vmem:[%s40 + $0xa0] sm:$0xff] %v81
        %v83 = vld [vmem:[%s39 + $0xa8] sm:$0xff]
        %84 = vst [vmem:[%s40 + $0xa8] sm:$0xff] %v83
        %v85 = vld [vmem:[%s39 + $0xb0] sm:$0xff]
        %86 = vst [vmem:[%s40 + $0xb0] sm:$0xff] %v85
        %v87 = vld [vmem:[%s39 + $0xb8] sm:$0xff]
        %88 = vst [vmem:[%s40 + $0xb8] sm:$0xff] %v87
        %v89 = vld [vmem:[%s39 + $0xc0] sm:$0xff]
        %90 = vst [vmem:[%s40 + $0xc0] sm:$0xff] %v89
        %v91 = vld [vmem:[%s39 + $0xc8] sm:$0xff]
        %92 = vst [vmem:[%s40 + $0xc8] sm:$0xff] %v91
        %v93 = vld [vmem:[%s39 + $0xd0] sm:$0xff]
        %94 = vst [vmem:[%s40 + $0xd0] sm:$0xff] %v93
        %v95 = vld [vmem:[%s39 + $0xd8] sm:$0xff]
        %96 = vst [vmem:[%s40 + $0xd8] sm:$0xff] %v95
        %v97 = vld [vmem:[%s39 + $0xe0] sm:$0xff]
        %98 = vst [vmem:[%s40 + $0xe0] sm:$0xff] %v97
        %v99 = vld [vmem:[%s39 + $0xe8] sm:$0xff]
        %100 = vst [vmem:[%s40 + $0xe8] sm:$0xff] %v99
        %v101 = vld [vmem:[%s39 + $0xf0] sm:$0xff]
        %102 = vst [vmem:[%s40 + $0xf0] sm:$0xff] %v101
        %v103 = vld [vmem:[%s39 + $0xf8] sm:$0xff]
        %104 = vst [vmem:[%s40 + $0xf8] sm:$0xff] %v103
      $region25: #{run.1} parent=19 // loop_footer
        %s38 = sadd.s32 1, %s34
      $region26: #{run.1} parent=19 // loop_footer_branch
        %33 = sbr.rel target = $region22
      $region27: #{run.1} parent=19 // loop_exit
        _
    $region20: #{run.1} parent=4 // pred_fallthru
      _
    %p105 = pneg %p29
    // Predicated region
    $region28: #{run.1} parent=4 // pred_check
      _
    $region29: #{run.1} parent=4 // pred_check_branch
      %107 = sbr.rel (%p29) target = $region31
    $region30: #{run.1} parent=4 // pred_region
      %s108 = sand.u32 256, 7
    $region31: #{run.1} parent=4 // pred_fallthru
      _
  $region5: #{run.1} parent=0 // pred_fallthru
    _
  // Predicated region
  $region6: #{run.1} parent=0 // pred_check
    %p14 = pneg %p10
  $region7: #{run.1} parent=0 // pred_check_branch
    %16 = sbr.rel (%p14) target = $region9
  $region8: #{run.1} parent=0 // pred_region
    %s17 = sshllo.u32 0, 256
    loop: start=0, step=1, limit=1
    $region10: #{run.1} parent=8 // loop_pre_header
      _
    $region11: #{run.1} parent=8 // loop_header
      %s19 = sphi 0, %s23
      %p20 = scmp.ge.s32.totalorder %s19, 1
      %s24 = sphi %s0, %s0
      %s25 = sphi %s2, %s2
    $region12: #{run.1} parent=8 // loop_header_branch
      %22 = sbr.rel (%p20) target = $region16
    $region13: #{run.1} parent=8 // loop_body
      %v26 = vld [vmem:[%s24] sm:%s17]
      %27 = vst [vmem:[%s25] sm:%s17] %v26
    $region14: #{run.1} parent=8 // loop_footer
      %s23 = sadd.s32 1, %s19
    $region15: #{run.1} parent=8 // loop_footer_branch
      %18 = sbr.rel target = $region11
    $region16: #{run.1} parent=8 // loop_exit
      _
  $region9: #{run.1} parent=0 // pred_fallthru
    _
  // Predicated region
  $region32: #{run.1} parent=0 // pred_check
    _
  $region33: #{run.1} parent=0 // pred_check_branch
    %111 = sbr.rel (0) target = $region35
  $region34: #{run.1} parent=0 // pred_region
    %112 = vsyncadd [#allocation2], 4096
  $region35: #{run.1} parent=0 // pred_fallthru
    _
  %s113 = scalar_lea.sflag [#allocation2], 1
  %s115 = sshll.u32 1, 14
  %s116 = sxor.u32 4294967295, %s115
  %s119 = sshll.u32 3, 24
  %s120 = sxor.u32 4294967295, %s119
  %s121 = sand.u32 0, %s120
  %s123 = sor.u32 %s121, 0
  %126 = dma.general %s1, 16384, %s3, %s113, [#allocation4], [#allocation5], %s123, 0
  %s127 = smul.u32 256, 1
  %s128 = sshll.u32 %s127, 4
  %129 = dma.done [#allocation2], %s128
  %s130 = smul.u32 1024, 1
  %s131 = sshll.u32 %s130, 4
  %132 = dma.done %s113, %s131
  %133 = vsyncmov [#allocation2]
  %s134 = vpop.sfrf %133
  %p135 = scmp.eq.s32.totalorder %s134, 0
  %p136 = pneg %p135
  %138 = shalt.err (%p136)
  %s139 = scalar_lea.sflag [#allocation2], 1
  %140 = vsyncmov %s139
  %s141 = vpop.sfrf %140
  %p142 = scmp.eq.s32.totalorder %s141, 0
  %p143 = pneg %p142
  %145 = shalt.err (%p143)

</llo_original>
